<compile_context>
chip_gen: v5e
topology: v5e:2x2
jax: 0.10.0
libtpu: 0.0.40
codegen_flags: <defaults>
</compile_context>

<pallas_src>
import functools

import jax
import jax.numpy as jnp
from jax.experimental import pallas as pl
from jax.experimental.pallas import tpu as pltpu


def _round_up(n, m):
    return ((n + m - 1) // m) * m


def _round_down(n, m):
    return max(m, (n // m) * m)


def _lr_kernel(x_ref, w_ref, b_ref, o_ref, *, use_mxu):
    # x_ref: (TB, F) VMEM; w_ref: (F, 128) or (1, F) VMEM; b_ref: (1, 1) SMEM;
    # o_ref: (TB, 1) VMEM.
    x = x_ref[...].astype(jnp.float32)
    w = w_ref[...].astype(jnp.float32)
    if use_mxu:
        # Small F: weight lives in column 0 of a (F, 128) matrix -> one MXU matmul
        # per 8 rows; logits are column 0 of the product.  Frees the XLU entirely.
        logits = jnp.dot(x, w, preferred_element_type=jnp.float32)[:, 0:1]
    else:
        # Large F: VPU multiply + cross-lane reduce, already hidden under tile DMA.
        logits = jnp.sum(x * w, axis=-1, keepdims=True)
    logits = logits + b_ref[0, 0]
    # Explicit sigmoid (exp on the EUP + a divide); avoids any dependence on
    # lax.logistic lowering.
    o_ref[...] = (1.0 / (1.0 + jnp.exp(-logits))).astype(o_ref.dtype)


def lr_forward(x, w, b):
    """LR forward:  sigmoid(x @ w.T + b).

    x: (B, F) f32, w: (1, F) f32 (PyTorch Linear layout), b: (1,) f32 -> (B, 1) f32.
    """
    B, F = x.shape
    assert w.shape == (1, F) and b.shape == (1,)

    use_mxu = F <= 128  # review item: XLU saturates for small F -> use the idle MXU

    # ---- Tile sizing: size by bytes, account for lane padding in VMEM -------
    f_pad = _round_up(F, 128)
    in_row_vmem = 4 * f_pad          # f32 row, lane-padded VMEM footprint
    out_row_vmem = 4 * 128           # (TB, 1) output block also lane-pads to 128

    hbm_tile_target = 8 << 20        # ~8 MiB of HBM bytes per grid step
    vmem_budget = 28 << 20           # 2*in + 2*out (+weight) -> safe on v7x (64 MiB)

    tb_hbm = _round_down(max(8, hbm_tile_target // (4 * F)), 8)
    tb_vmem = _round_down(max(8, vmem_budget // (2 * in_row_vmem + 2 * out_row_vmem)), 8)
    tb_pair = _round_up(max(1, (B + 1) // 2), 8)   # keep >= 2 grid steps (v7x megacore)
    TB = max(8, min(tb_hbm, tb_vmem, tb_pair))
    grid = pl.cdiv(B, TB)

    # Scoped-VMEM limit derived from the actual double-buffered footprint.
    if use_mxu:
        w_vmem = 2 * _round_up(F, 8) * 128 * 4
    else:
        w_vmem = 2 * 8 * f_pad * 4
    vmem_bytes = 2 * TB * in_row_vmem + 2 * TB * out_row_vmem + w_vmem + (2 << 20)
    vmem_limit = int(min(32 << 20, max(16 << 20, vmem_bytes)))

    # ---- Operands ------------------------------------------------------------
    if use_mxu:
        w_op = jnp.zeros((F, 128), jnp.float32).at[:, 0].set(
            w.astype(jnp.float32).reshape(F))
        w_spec = pl.BlockSpec((F, 128), lambda i: (0, 0))      # resident weight
    else:
        w_op = w.astype(jnp.float32)
        w_spec = pl.BlockSpec((1, F), lambda i: (0, 0))        # resident weight row
    b_smem = jnp.asarray(b, jnp.float32).reshape(1, 1)

    cost = pl.CostEstimate(
        flops=int(2 * B * F + B),
        transcendentals=int(B),
        bytes_accessed=int(4 * B * F + 4 * B + 4 * w_op.size + 4),
    )

    return pl.pallas_call(
        functools.partial(_lr_kernel, use_mxu=use_mxu),
        out_shape=jax.ShapeDtypeStruct((B, 1), jnp.float32),
        grid_spec=pltpu.PrefetchScalarGridSpec(
            num_scalar_prefetch=0,
            grid=(grid,),
            in_specs=[
                pl.BlockSpec((TB, F), lambda i: (i, 0)),               # streamed x tile
                w_spec,                                                # weight, resident
                pl.BlockSpec(memory_space=pltpu.MemorySpace.SMEM),     # scalar bias
            ],
            out_specs=pl.BlockSpec((TB, 1), lambda i: (i, 0)),
        ),
        compiler_params=pltpu.CompilerParams(
            dimension_semantics=("parallel",),
            vmem_limit_bytes=vmem_limit,
        ),
        cost_estimate=cost,
    )(x, w_op, b_smem)


def _ref_forward(x, w, b):
    # Exact f32 reference (pure elementwise, no matmul-precision ambiguity).
    logits = jnp.sum(x * w, axis=-1, keepdims=True) + b
    return 1.0 / (1.0 + jnp.exp(-logits))


def _check(out, ref, atol):
    assert out.shape == ref.shape, (out.shape, ref.shape)
    err = float(jnp.max(jnp.abs(out - ref)))
    assert bool(jnp.allclose(out, ref, atol=atol, rtol=atol)), f"max abs err {err}"


if __name__ == "__main__":
    key = jax.random.PRNGKey(0)
    k_x, k_w, k_b, k_x2, k_x3, k_w3 = jax.random.split(key, 6)

    # ---- Case 1: small single-tile, F=32 (MXU reduction path) ---------------
    batch, n_features = 8, 32
    bound = 1.0 / jnp.sqrt(jnp.float32(n_features))
    x = jax.random.normal(k_x, (batch, n_features), dtype=jnp.float32)
    w = jax.random.uniform(k_w, (1, n_features), jnp.float32, minval=-bound, maxval=bound)
    b = jax.random.uniform(k_b, (1,), jnp.float32, minval=-bound, maxval=bound)

    out = lr_forward(x, w, b)
    jax.block_until_ready(out)
    _check(out, _ref_forward(x, w, b), atol=1e-4)   # MXU f32 matmul ~1e-6; margin

    # ---- Case 2: multi-tile, B not a multiple of TB (partial tail block) ----
    x2 = jax.random.normal(k_x2, (300, n_features), dtype=jnp.float32)
    out2 = lr_forward(x2, w, b)
    jax.block_until_ready(out2)
    _check(out2, _ref_forward(x2, w, b), atol=1e-4)

    # ---- Case 3: large F (VPU + XLU lane-reduce path) ------------------------
    n_features3 = 256
    bound3 = 1.0 / jnp.sqrt(jnp.float32(n_features3))
    x3 = jax.random.normal(k_x3, (64, n_features3), dtype=jnp.float32)
    w3 = jax.random.uniform(k_w3, (1, n_features3), jnp.float32, minval=-bound3, maxval=bound3)
    out3 = lr_forward(x3, w3, b)
    jax.block_until_ready(out3)
    _check(out3, _ref_forward(x3, w3, b), atol=1e-5)

    print("KERNEL_OK")
</pallas_src>

<mosaic_0001>
module attributes {stable_mosaic.version = 11 : i64} {
  func.func @_lr_kernel(%arg0: i32, %arg1: memref<8x32xf32, #tpu.memory_space<vmem>>, %arg2: memref<32x128xf32, #tpu.memory_space<vmem>>, %arg3: memref<1x1xf32, #tpu.memory_space<smem>>, %arg4: memref<8x1xf32, #tpu.memory_space<vmem>>) attributes {dimension_semantics = [#tpu.dimension_semantics<parallel>], iteration_bounds = array<i64: 1>, scalar_prefetch = 0 : i64, scratch_operands = 0 : i64, tpu.core_type = #tpu.core_type<tc>, window_params = [{transform_indices = @transform_0, window_bounds = array<i64: 8, 32>}, {pipeline_mode = #tpu.pipeline_mode<synchronous>, transform_indices = @transform_1, window_bounds = array<i64: 32, 128>}, {transform_indices = @transform_2, window_bounds = array<i64: 1, 1>}, {transform_indices = @transform_3, window_bounds = array<i64: 8, 1>}]} {
    %c0 = arith.constant 0 : index
    %c0_0 = arith.constant 0 : index
    %0 = vector.load %arg1[%c0, %c0_0] : memref<8x32xf32, #tpu.memory_space<vmem>>, vector<8x32xf32>
    %c0_1 = arith.constant 0 : index
    %c0_2 = arith.constant 0 : index
    %1 = vector.load %arg2[%c0_1, %c0_2] : memref<32x128xf32, #tpu.memory_space<vmem>>, vector<32x128xf32>
    %cst = arith.constant dense<0.000000e+00> : vector<8x128xf32>
    %2 = tpu.matmul %0, %1, %cst {dimension_numbers = #tpu.dot_dimension_numbers<[1], [0], [0], [1], [0, 0, 1, 1], [], []>} : vector<8x32xf32>, vector<32x128xf32>, vector<8x128xf32> -> vector<8x128xf32>
    %3 = vector.extract_strided_slice %2 {offsets = [0, 0], sizes = [8, 1], strides = [1, 1]} : vector<8x128xf32> to vector<8x1xf32>
    %c0_3 = arith.constant 0 : index
    %c0_4 = arith.constant 0 : index
    %4 = memref.load %arg3[%c0_3, %c0_4] : memref<1x1xf32, #tpu.memory_space<smem>>
    %5 = vector.broadcast %4 : f32 to vector<8x1xf32>
    %6 = arith.addf %3, %5 : vector<8x1xf32>
    %cst_5 = arith.constant 0.000000e+00 : f32
    %7 = vector.broadcast %cst_5 : f32 to vector<8x1xf32>
    %8 = arith.subf %7, %6 : vector<8x1xf32>
    %9 = math.exp %8 : vector<8x1xf32>
    %cst_6 = arith.constant 1.000000e+00 : f32
    %10 = vector.broadcast %cst_6 : f32 to vector<8x1xf32>
    %11 = arith.addf %10, %9 : vector<8x1xf32>
    %cst_7 = arith.constant 1.000000e+00 : f32
    %12 = vector.broadcast %cst_7 : f32 to vector<8x1xf32>
    %13 = arith.divf %12, %11 : vector<8x1xf32>
    %c0_8 = arith.constant 0 : index
    %c0_9 = arith.constant 0 : index
    %14 = vector.load %arg4[%c0_8, %c0_9] : memref<8x1xf32, #tpu.memory_space<vmem>>, vector<8x1xf32>
    tpu.vector_store %arg4[%c0_8, %c0_9], %13 {strides = array<i32>} : memref<8x1xf32, #tpu.memory_space<vmem>>, vector<8x1xf32>,
    return
  }
  func.func @transform_0(%arg0: i32) -> (i32, i32) {
    %c0_i32 = arith.constant 0 : i32
    %c0_i32_0 = arith.constant 0 : i32
    return %arg0, %c0_i32 : i32, i32
  }
  func.func @transform_1(%arg0: i32) -> (i32, i32) {
    %c0_i32 = arith.constant 0 : i32
    %c0_i32_0 = arith.constant 0 : i32
    %c0_i32_1 = arith.constant 0 : i32
    return %c0_i32, %c0_i32_0 : i32, i32
  }
  func.func @transform_2(%arg0: i32) -> (i32, i32) {
    %c0_i32 = arith.constant 0 : i32
    %c0_i32_0 = arith.constant 0 : i32
    %c0_i32_1 = arith.constant 0 : i32
    return %c0_i32, %c0_i32_0 : i32, i32
  }
  func.func @transform_3(%arg0: i32) -> (i32, i32) {
    %c0_i32 = arith.constant 0 : i32
    %c0_i32_0 = arith.constant 0 : i32
    return %arg0, %c0_i32 : i32, i32
  }
}

</mosaic_0001>

<llo_original>
// kernel: tpu_custom_call.1
$region0: #{tpu_custom_call.1}
  #allocation0 [shape = 'u32[]', space=smem, size = 0x4, offset = 0x4, fixed_abs, tag = 'smem constant byte address 0x4 - core index']
  #allocation1 [shape = 'u32[72,128]{1,0:T(1,128)}', space=vmem, size = 0x9000, scoped, tag = 'internal scratch']
  #allocation2 [shape = 'f32[1,1]{1,0:T(1,128)S(6)}', space=smem, size = 0x200, scoped, tag = 'scoped memory for tpu_custom_call.1']
  %s0 = inlined_call_operand.hbm [shape: f32[8,32], index: 0, kind: input, shape index: {}]
  %s1 = inlined_call_operand.hbm [shape: f32[32,128], index: 1, kind: input, shape index: {}]
  %s2 = inlined_call_operand.<no memory space> [shape: f32[1,1], index: 2, kind: input, shape index: {}]
  %s3 = inlined_call_operand.vmem [shape: f32[8,1], index: 3, kind: output, shape index: {}]
  %s4 = sld [smem:[#allocation0]]
  $region30: #{tpu_custom_call.1} parent=0
    _
  %s6 = ssub.s32 1, %s4
  %s7 = scalar_select 0, %s6, %s4
  %8 = sst [smem:[#allocation2]] %s2
  $region1: #{tpu_custom_call.1} parent=0
    #allocation3 [shape = 'u8[4096]{0}', space=vmem, size = 0x1000, scoped, tag = 'input window, operand 0, single buffered']
    #allocation4 [shape = 's32[1]{0}', space=sflag, size = 0x4, scoped, tag = 'scoped memory for tpu_custom_call.1']
    #allocation5 [shape = 'u8[16384]{0}', space=vmem, size = 0x4000, scoped, tag = 'input window, operand 1, single buffered']
    #allocation6 [shape = 's32[1]{0}', space=sflag, size = 0x4, scoped, tag = 'scoped memory for tpu_custom_call.1']
    %9 = vsyncpa [#allocation4], 0
    %10 = vsyncpa [#allocation6], 0
    // Predicated region
    $region2: #{tpu_custom_call.1} parent=1 // pred_check
      _
    $region3: #{tpu_custom_call.1} parent=1 // pred_check_branch
      %12 = sbr.rel (0) target = $region5
    $region4: #{tpu_custom_call.1} parent=1 // pred_region
      %14 = vsyncadd [#allocation4], 0
      %s16 = sshll.u32 %s0, 4
      %s17 = int_to_ptr.hbm [resolvable:$true] %s16
      %s18 = sshll.u32 [#allocation3], 4
      %s19 = int_to_ptr.vmem [resolvable:$true] %s18
      %21 = dma.hbm_to_vmem [thread:$0]  %s17, 128, %s19, [#allocation4]
    $region5: #{tpu_custom_call.1} parent=1 // pred_fallthru
      _
    // Predicated region
    $region6: #{tpu_custom_call.1} parent=1 // pred_check
      _
    $region7: #{tpu_custom_call.1} parent=1 // pred_check_branch
      %23 = sbr.rel (0) target = $region9
    $region8: #{tpu_custom_call.1} parent=1 // pred_region
      %25 = vsyncadd [#allocation6], 0
      %s26 = sshll.u32 %s1, 4
      %s27 = int_to_ptr.hbm [resolvable:$true] %s26
      %s28 = sshll.u32 [#allocation5], 4
      %s29 = int_to_ptr.vmem [resolvable:$true] %s28
      %34 = dma.hbm_to_vmem [thread:$0]  %s27, 512, %s29, [#allocation6], 128, 128, 8
    $region9: #{tpu_custom_call.1} parent=1 // pred_fallthru
      _
    // Predicated region
    $region10: #{tpu_custom_call.1} parent=1 // pred_check
      _
    $region11: #{tpu_custom_call.1} parent=1 // pred_check_branch
      %36 = sbr.rel (0) target = $region13
    $region12: #{tpu_custom_call.1} parent=1 // pred_region
      _
    $region13: #{tpu_custom_call.1} parent=1 // pred_fallthru
      _
    // Predicated region
    $region14: #{tpu_custom_call.1} parent=1 // pred_check
      _
    $region15: #{tpu_custom_call.1} parent=1 // pred_check_branch
      %38 = sbr.rel (0) target = $region17
    $region16: #{tpu_custom_call.1} parent=1 // pred_region
      %40 = dma.done [#allocation4], 128
    $region17: #{tpu_custom_call.1} parent=1 // pred_fallthru
      _
    // Predicated region
    $region18: #{tpu_custom_call.1} parent=1 // pred_check
      _
    $region19: #{tpu_custom_call.1} parent=1 // pred_check_branch
      %42 = sbr.rel (0) target = $region21
    $region20: #{tpu_custom_call.1} parent=1 // pred_region
      %44 = dma.done [#allocation6], 512
    $region21: #{tpu_custom_call.1} parent=1 // pred_fallthru
      _
    %v45 = vld [vmem:[#allocation3] sm:$0xff]
    %v46 = vld [vmem:[#allocation5] sm:$0xff]
    %v47 = vld [vmem:[#allocation5 + $0x8] sm:$0xff]
    %v48 = vld [vmem:[#allocation5 + $0x10] sm:$0xff]
    %v49 = vld [vmem:[#allocation5 + $0x18] sm:$0xff]
    %vm50 = vcmask 261120
    %v52 = vsel %vm50, %v45, 0
    %54 = vmatpush.msra.mxu0 0.0
    %55 = vmatpush.msra.mxu0 0.0
    %56 = vmatpush.msra.mxu0 0.0
    %57 = vmatpush.msra.mxu0 0.0
    %58 = vmatpush.msra.mxu0 0.0
    %59 = vmatpush.msra.mxu0 0.0
    %60 = vmatpush.msra.mxu0 0.0
    %61 = vmatpush.msra.mxu0 0.0
    %62 = vmatpush.msra.mxu0 0.0
    %63 = vmatpush.msra.mxu0 0.0
    %64 = vmatpush.msra.mxu0 0.0
    %65 = vmatpush.msra.mxu0 0.0
    %66 = vmatpush.msra.mxu0 %v49
    %67 = vmatpush.msra.mxu0 %v48
    %68 = vmatpush.msra.mxu0 %v47
    %69 = vmatpush.msra.mxu0 %v46
    %70 = vmatmul.f32.gmra.mxu0 %v52
    %v71 = vpop.f32.mrf.mxu0
    %v72 = vadd.f32 0.0, %v71
    %73 = vdwg.mxu0
    %s74 = sld [smem:[#allocation2]]
    %v75 = vstv %s74
    %v76 = vadd.f32 %v72, %v75
    %v77 = vsub.f32 0.0, %v76
    %v78 = vmul.f32 %v77, 1.442695
    %v79 = vpow.pop %v78
    %v80 = vadd.f32 %v79, 1.0
    %v81 = vrcp.pop %v80
    %v82 = vmul.f32 %v80, %v81
    %v83 = vsub.f32 1.0, %v82
    %v84 = vmul.f32 %v81, %v83
    %v85 = vadd.f32 %v81, %v84
    %vm86 = vweird.f32 %v80
    %vm87 = vweird.f32 %v81
    %vm88 = vmor %vm86, %vm87
    %v89 = vsel %vm88, %v81, %v85
    %v90 = vand.u32 2147483647, %v80
    %vm91 = vcmp.eq.f32.partialorder %v90, 8.507059e+37
    %v92 = vand.u32 %v80, 2147483648
    %v93 = vor.u32 1.1754944e-38, %v92
    %v94 = vsel %vm91, %v93, %v89
    %v95 = vmul.f32 1.0, %v94
    %vm96 = vcmask 7168
    %97 = vst.msk [vmem:[%s3] sm:$0xff] %vm96, %v95
    // Predicated region
    $region22: #{tpu_custom_call.1} parent=1 // pred_check
      _
    $region23: #{tpu_custom_call.1} parent=1 // pred_check_branch
      %99 = sbr.rel (0) target = $region25
    $region24: #{tpu_custom_call.1} parent=1 // pred_region
      _
    $region25: #{tpu_custom_call.1} parent=1 // pred_fallthru
      _
    // Predicated region
    $region26: #{tpu_custom_call.1} parent=1 // pred_check
      _
    $region27: #{tpu_custom_call.1} parent=1 // pred_check_branch
      %101 = sbr.rel (0) target = $region29
    $region28: #{tpu_custom_call.1} parent=1 // pred_region
      _
    $region29: #{tpu_custom_call.1} parent=1 // pred_fallthru
      _
    %102 = vsyncpa [#allocation4], 1
    %103 = vsyncpa [#allocation6], 1

</llo_original>
